<compile_context>
chip_gen: v7x
topology: tpu7x:2x2x1
jax: 0.10.0
libtpu: 0.0.40
codegen_flags: <defaults>
</compile_context>

<pallas_src>
import functools

import jax
import jax.numpy as jnp
from jax.experimental import pallas as pl
from jax.experimental.pallas import tpu as pltpu


def _temporal_block_kernel(halo_ref, cur_ref, w_ref, shift_ref, o_ref, *,
                           K, dilation, Hb, TL):
    """One (batch, time-tile) grid step.

    halo_ref:  (1, C_in, Hb)       the Hb columns immediately left of this tile
    cur_ref:   (1, C_in, TL)       current lane-dense time tile of x
    w_ref:     (C_out, K*C_in)     merged tap weights (BN scale + residual folded)
    shift_ref: (C_out, 1)          fused conv-bias / BN-shift / downsample-bias (f32)
    o_ref:     (1, C_out, TL)      lane-dense output tile
    """
    j = pl.program_id(1)
    cur = cur_ref[0]                                       # (C_in, TL)
    halo = halo_ref[0]                                     # (C_in, Hb)
    # First time tile: the halo region lies in the causal zero-padding.
    halo = jnp.where(j > 0, halo, jnp.zeros_like(halo))
    win = jnp.concatenate([halo, cur], axis=-1)            # (C_in, Hb + TL)

    # Stack the K dilated-tap windows along the sublane axis (static offsets) and
    # contract them all in a single MXU matmul.
    taps = []
    for k in range(K):
        off = Hb - (K - 1 - k) * dilation                  # static, 0 <= off <= Hb
        taps.append(win[:, off:off + TL])
    x_stk = jnp.concatenate(taps, axis=0) if K > 1 else taps[0]   # (K*C_in, TL)

    acc = jnp.dot(w_ref[...], x_stk, preferred_element_type=jnp.float32)
    o_ref[0] = jnp.maximum(acc + shift_ref[...], 0.0).astype(o_ref.dtype)


def _round_up(x, m):
    return ((x + m - 1) // m) * m


def _choose_time_tile(L, pad, C_in, C_out, K, itemsize, budget_bytes, big_vmem):
    """Pick a lane-dense time tile (multiple of the 128-aligned halo) dividing L."""
    if L % 128 != 0 or L <= 256:
        return L
    hb = _round_up(max(pad, 1), 128)
    if hb > L or L % hb != 0:
        return L
    cands = [t for t in range(hb, L + 1, hb) if L % t == 0]
    if not cands:
        return L
    # Keep the f32 (C_out, TL) matmul result well below vreg-spill territory.
    acc_cap = max(hb, (512 * 1024) // (4 * max(C_out, 1)))
    target = min(2048 if big_vmem else 1024, acc_cap)

    def per_step_bytes(t):
        return (2 * C_in * (t + hb) * itemsize      # double-buffered x tile + halo
                + 2 * C_out * t * itemsize          # double-buffered output tile
                + K * C_in * t * itemsize           # stacked MXU operand
                + C_out * t * 4                     # f32 matmul result
                + (K * C_in * C_out + C_out) * 4)   # resident weights + shift

    ok = [t for t in cands if t <= acc_cap and per_step_bytes(t) <= budget_bytes]
    if not ok:
        return min(cands)
    below = [t for t in ok if t <= target]
    return max(below) if below else min(ok)


def temporal_block_forward(x, params, *, kernel_size, stride, dilation, padding,
                           eps=1e-5, compute_dtype=None, time_tile=None):
    """x: (N, C_in, L).  Returns (N, C_out, L).  Eval-mode TemporalBlock."""
    assert stride == 1, "TCN TemporalBlock uses stride=1"
    K = kernel_size
    assert padding == (K - 1) * dilation and padding > 0, \
        "causal TCN block expects padding == (kernel_size - 1) * dilation"
    N, C_in, L = x.shape
    assert padding <= L, "causal padding larger than the sequence is not supported"
    w_conv = params["conv_w"]                                    # (C_out, C_in, K)
    C_out = w_conv.shape[0]

    # ---- fold conv bias + eval-mode BN + residual into merged weights/shift ----
    f32 = jnp.float32
    s = params["bn_gamma"].astype(f32) * jax.lax.rsqrt(params["bn_var"].astype(f32) + eps)
    w_eff = w_conv.astype(f32) * s[:, None, None]                # (C_out, C_in, K)
    shift = (s * params["conv_b"].astype(f32)
             + params["bn_beta"].astype(f32)
             - s * params["bn_mean"].astype(f32))
    if "ds_w" in params:                     # 1x1-conv residual (n_inputs != n_outputs)
        res_w = params["ds_w"][:, :, 0].astype(f32)              # (C_out, C_in)
        shift = shift + params["ds_b"].astype(f32)
    else:                                    # identity residual
        assert C_in == C_out
        res_w = jnp.eye(C_out, dtype=f32)
    # The residual reads x[:, t] == tap K-1's window -> fold it into that tap.
    w_eff = w_eff.at[:, :, K - 1].add(res_w)
    # Merged tap layout (C_out, K*C_in): column block k == tap k.  The kernel
    # stacks the K shifted x windows along sublanes in the same order, so the
    # whole dilated conv + residual is ONE MXU contraction per tile.
    w_merged = jnp.transpose(w_eff, (0, 2, 1)).reshape(C_out, K * C_in)
    shift = shift.reshape(C_out, 1)

    # TODO(synk): training-mode dropout (random mask) not implemented (eval semantics).
    cdt = jnp.dtype(compute_dtype) if compute_dtype is not None else x.dtype
    x_c = x.astype(cdt)
    w_c = w_merged.astype(cdt)
    itemsize = jnp.dtype(cdt).itemsize

    # ---- generation-aware VMEM budget (v5e/v6e: 128 MiB, v7x: 64 MiB) ----
    try:
        cap = int(getattr(pltpu.get_tpu_info(), "vmem_capacity_bytes", 0))
    except Exception:
        cap = 0
    if cap <= 0:
        cap = 64 * 1024 * 1024                  # conservative (v7x-sized) fallback
    vmem_limit = int(0.8 * cap)                 # leave headroom for Mosaic scratch

    TL = time_tile if time_tile is not None else _choose_time_tile(
        L, padding, C_in, C_out, K, itemsize,
        budget_bytes=int(0.6 * vmem_limit), big_vmem=cap >= 96 * 1024 * 1024)
    assert L % TL == 0 and TL >= padding and (TL == L or TL % 128 == 0), \
        f"invalid time tile {TL} for L={L}, padding={padding}"
    nL = L // TL

    # Halo block: smallest 128-aligned window covering the causal history the K
    # dilated taps reach back into; falls back to a full tile for tiny shapes.
    Hb = TL
    if TL % 128 == 0:
        h = _round_up(max(padding, 1), 128)
        if h <= TL and TL % h == 0:
            Hb = h
    r = TL // Hb

    kernel = functools.partial(_temporal_block_kernel, K=K, dilation=dilation,
                               Hb=Hb, TL=TL)

    # TODO(synk): for very small C_in/C_out, pack several batch rows per grid step
    # and/or zero-pad channels to the MXU width (128 on v5e, 256 on v6e/v7x).
    return pl.pallas_call(
        kernel,
        out_shape=jax.ShapeDtypeStruct((N, C_out, L), cdt),
        grid=(N, nL),
        in_specs=[
            # halo: the Hb columns immediately left of this tile (prev tile's tail)
            pl.BlockSpec((1, C_in, Hb),
                         lambda n, j: (n, 0, jnp.maximum(j * r - 1, 0))),
            # current lane-dense time tile of x
            pl.BlockSpec((1, C_in, TL), lambda n, j: (n, 0, j)),
            # merged weights + fused shift: constant index -> fetched once, resident
            pl.BlockSpec((C_out, K * C_in), lambda n, j: (0, 0)),
            pl.BlockSpec((C_out, 1), lambda n, j: (0, 0)),
        ],
        out_specs=pl.BlockSpec((1, C_out, TL), lambda n, j: (n, 0, j)),
        compiler_params=pltpu.CompilerParams(
            dimension_semantics=("parallel", "parallel"),
            vmem_limit_bytes=vmem_limit),
    )(x_c, x_c, w_c, shift)


def _reference_forward(x, params, *, kernel_size, stride, dilation, padding, eps=1e-5):
    """Pure-JAX reference mirroring the PyTorch module (eval mode)."""
    out = jax.lax.conv_general_dilated(
        x, params["conv_w"], window_strides=(stride,),
        padding=[(padding, padding)], rhs_dilation=(dilation,),
        dimension_numbers=("NCH", "OIH", "NCH"))
    out = out + params["conv_b"][None, :, None]
    out = out[:, :, :-padding]                                   # Chomp1d
    scale = params["bn_gamma"] / jnp.sqrt(params["bn_var"] + eps)
    out = (out - params["bn_mean"][None, :, None]) * scale[None, :, None] \
        + params["bn_beta"][None, :, None]
    if "ds_w" in params:
        res = jax.lax.conv_general_dilated(
            x, params["ds_w"], window_strides=(1,), padding=[(0, 0)],
            dimension_numbers=("NCH", "OIH", "NCH")) + params["ds_b"][None, :, None]
    else:
        res = x
    return jnp.maximum(out + res, 0.0)


if __name__ == "__main__":
    key = jax.random.PRNGKey(0)

    def make_params(k, C_in, C_out, K, downsample):
        ks = jax.random.split(k, 4)
        p = {
            "conv_w": 0.01 * jax.random.normal(ks[0], (C_out, C_in, K), jnp.float32),
            "conv_b": 0.1 * jax.random.normal(ks[1], (C_out,), jnp.float32),
            "bn_gamma": jnp.ones((C_out,), jnp.float32),
            "bn_beta": jnp.zeros((C_out,), jnp.float32),
            "bn_mean": jnp.zeros((C_out,), jnp.float32),
            "bn_var": jnp.ones((C_out,), jnp.float32),
        }
        if downsample:
            p["ds_w"] = 0.01 * jax.random.normal(ks[2], (C_out, C_in, 1), jnp.float32)
            p["ds_b"] = 0.1 * jax.random.normal(ks[3], (C_out,), jnp.float32)
        return p

    k1, k2, k3, k4 = jax.random.split(key, 4)

    # --- check 1: small block with 1x1 downsample (n_inputs != n_outputs) ---
    N, C_in, C_out, L = 2, 4, 8, 16
    K, dil = 3, 2
    pad = (K - 1) * dil
    x = jax.random.normal(k1, (N, C_in, L), jnp.float32)
    params = make_params(k2, C_in, C_out, K, downsample=True)
    y = jax.block_until_ready(temporal_block_forward(
        x, params, kernel_size=K, stride=1, dilation=dil, padding=pad))
    y_ref = _reference_forward(x, params, kernel_size=K, stride=1,
                               dilation=dil, padding=pad)
    assert y.shape == (N, C_out, L)
    assert jnp.allclose(y, y_ref, rtol=1e-4, atol=1e-4), \
        f"check1 max abs err {jnp.max(jnp.abs(y - y_ref))}"

    # --- check 2: identity residual + multiple time tiles (exercises halo path) ---
    N2, C2, L2, K2, dil2 = 2, 16, 512, 3, 4
    pad2 = (K2 - 1) * dil2
    x2 = jax.random.normal(k3, (N2, C2, L2), jnp.float32)
    params2 = make_params(k4, C2, C2, K2, downsample=False)
    y2 = jax.block_until_ready(temporal_block_forward(
        x2, params2, kernel_size=K2, stride=1, dilation=dil2, padding=pad2,
        time_tile=128))
    y2_ref = _reference_forward(x2, params2, kernel_size=K2, stride=1,
                                dilation=dil2, padding=pad2)
    assert jnp.allclose(y2, y2_ref, rtol=1e-4, atol=1e-4), \
        f"check2 max abs err {jnp.max(jnp.abs(y2 - y2_ref))}"

    # --- check 3: bf16 activations/weights (f32 accumulation), looser tolerance ---
    # NOTE: with bf16 compute the identity/1x1 residual is folded into bf16 weights,
    # so the skip path loses a little precision vs. the fp32 PyTorch skip-add.
    y3 = jax.block_until_ready(temporal_block_forward(
        x, params, kernel_size=K, stride=1, dilation=dil, padding=pad,
        compute_dtype=jnp.bfloat16))
    assert jnp.allclose(y3.astype(jnp.float32), y_ref, rtol=5e-2, atol=5e-2), \
        f"check3 max abs err {jnp.max(jnp.abs(y3.astype(jnp.float32) - y_ref))}"

    print("KERNEL_OK")
</pallas_src>

<mosaic_0001>
module attributes {stable_mosaic.version = 11 : i64} {
  func.func @_temporal_block_kernel(%arg0: i32, %arg1: i32, %arg2: memref<1x4x16xf32, #tpu.memory_space<vmem>>, %arg3: memref<1x4x16xf32, #tpu.memory_space<vmem>>, %arg4: memref<8x12xf32, #tpu.memory_space<vmem>>, %arg5: memref<8x1xf32, #tpu.memory_space<vmem>>, %arg6: memref<1x8x16xf32, #tpu.memory_space<vmem>>) attributes {dimension_semantics = [#tpu.dimension_semantics<parallel>, #tpu.dimension_semantics<parallel>], iteration_bounds = array<i64: 2, 1>, scalar_prefetch = 0 : i64, scratch_operands = 0 : i64, tpu.core_type = #tpu.core_type<tc>, window_params = [{transform_indices = @transform_0, window_bounds = array<i64: 1, 4, 16>}, {transform_indices = @transform_1, window_bounds = array<i64: 1, 4, 16>}, {pipeline_mode = #tpu.pipeline_mode<synchronous>, transform_indices = @transform_2, window_bounds = array<i64: 8, 12>}, {pipeline_mode = #tpu.pipeline_mode<synchronous>, transform_indices = @transform_3, window_bounds = array<i64: 8, 1>}, {transform_indices = @transform_4, window_bounds = array<i64: 1, 8, 16>}]} {
    %c0 = arith.constant 0 : index
    %c0_0 = arith.constant 0 : index
    %c0_1 = arith.constant 0 : index
    %0 = vector.load %arg3[%c0, %c0_0, %c0_1] : memref<1x4x16xf32, #tpu.memory_space<vmem>>, vector<1x4x16xf32>
    %1 = vector.shape_cast %0 : vector<1x4x16xf32> to vector<4x16xf32>
    %c0_2 = arith.constant 0 : index
    %c0_3 = arith.constant 0 : index
    %c0_4 = arith.constant 0 : index
    %2 = vector.load %arg2[%c0_2, %c0_3, %c0_4] : memref<1x4x16xf32, #tpu.memory_space<vmem>>, vector<1x4x16xf32>
    %3 = vector.shape_cast %2 : vector<1x4x16xf32> to vector<4x16xf32>
    %c0_i32 = arith.constant 0 : i32
    %4 = arith.cmpi sgt, %arg1, %c0_i32 : i32
    %cst = arith.constant 0.000000e+00 : f32
    %5 = vector.broadcast %cst : f32 to vector<4x16xf32>
    %6 = arith.select %4, %3, %5 : vector<4x16xf32>
    %7 = tpu.concatenate %6, %1 in 1 : vector<4x16xf32>, vector<4x16xf32> -> vector<4x32xf32>
    %8 = vector.extract_strided_slice %7 {offsets = [0, 12], sizes = [4, 16], strides = [1, 1]} : vector<4x32xf32> to vector<4x16xf32>
    %9 = vector.extract_strided_slice %7 {offsets = [0, 14], sizes = [4, 16], strides = [1, 1]} : vector<4x32xf32> to vector<4x16xf32>
    %10 = vector.extract_strided_slice %7 {offsets = [0, 16], sizes = [4, 16], strides = [1, 1]} : vector<4x32xf32> to vector<4x16xf32>
    %11 = tpu.concatenate %8, %9, %10 in 0 : vector<4x16xf32>, vector<4x16xf32>, vector<4x16xf32> -> vector<12x16xf32>
    %c0_5 = arith.constant 0 : index
    %c0_6 = arith.constant 0 : index
    %12 = vector.load %arg4[%c0_5, %c0_6] : memref<8x12xf32, #tpu.memory_space<vmem>>, vector<8x12xf32>
    %cst_7 = arith.constant dense<0.000000e+00> : vector<8x16xf32>
    %13 = tpu.matmul %12, %11, %cst_7 {dimension_numbers = #tpu.dot_dimension_numbers<[1], [0], [0], [1], [0, 0, 1, 1], [], []>} : vector<8x12xf32>, vector<12x16xf32>, vector<8x16xf32> -> vector<8x16xf32>
    %c0_8 = arith.constant 0 : index
    %c0_9 = arith.constant 0 : index
    %14 = vector.load %arg5[%c0_8, %c0_9] : memref<8x1xf32, #tpu.memory_space<vmem>>, vector<8x1xf32>
    %15 = vector.broadcast %14 : vector<8x1xf32> to vector<8x16xf32>
    %16 = arith.addf %13, %15 : vector<8x16xf32>
    %cst_10 = arith.constant 0.000000e+00 : f32
    %17 = vector.broadcast %cst_10 : f32 to vector<8x16xf32>
    %18 = arith.maximumf %16, %17 : vector<8x16xf32>
    %c0_11 = arith.constant 0 : index
    %c0_12 = arith.constant 0 : index
    %c0_13 = arith.constant 0 : index
    %19 = vector.load %arg6[%c0_11, %c0_12, %c0_13] : memref<1x8x16xf32, #tpu.memory_space<vmem>>, vector<1x8x16xf32>
    %20 = vector.shape_cast %19 : vector<1x8x16xf32> to vector<8x16xf32>
    %21 = vector.shape_cast %18 : vector<8x16xf32> to vector<1x8x16xf32>
    tpu.vector_store %arg6[%c0_11, %c0_12, %c0_13], %21 {strides = array<i32>} : memref<1x8x16xf32, #tpu.memory_space<vmem>>, vector<1x8x16xf32>,
    return
  }
  func.func @transform_0(%arg0: i32, %arg1: i32) -> (i32, i32, i32) {
    %c1_i32 = arith.constant 1 : i32
    %0 = arith.muli %arg1, %c1_i32 : i32
    %c1_i32_0 = arith.constant 1 : i32
    %1 = arith.subi %0, %c1_i32_0 : i32
    %c0_i32 = arith.constant 0 : i32
    %2 = arith.maxsi %1, %c0_i32 : i32
    %c0_i32_1 = arith.constant 0 : i32
    %c0_i32_2 = arith.constant 0 : i32
    return %arg0, %c0_i32_1, %2 : i32, i32, i32
  }
  func.func @transform_1(%arg0: i32, %arg1: i32) -> (i32, i32, i32) {
    %c0_i32 = arith.constant 0 : i32
    %c0_i32_0 = arith.constant 0 : i32
    return %arg0, %c0_i32, %arg1 : i32, i32, i32
  }
  func.func @transform_2(%arg0: i32, %arg1: i32) -> (i32, i32) {
    %c0_i32 = arith.constant 0 : i32
    %c0_i32_0 = arith.constant 0 : i32
    %c0_i32_1 = arith.constant 0 : i32
    return %c0_i32, %c0_i32_0 : i32, i32
  }
  func.func @transform_3(%arg0: i32, %arg1: i32) -> (i32, i32) {
    %c0_i32 = arith.constant 0 : i32
    %c0_i32_0 = arith.constant 0 : i32
    %c0_i32_1 = arith.constant 0 : i32
    return %c0_i32, %c0_i32_0 : i32, i32
  }
  func.func @transform_4(%arg0: i32, %arg1: i32) -> (i32, i32, i32) {
    %c0_i32 = arith.constant 0 : i32
    %c0_i32_0 = arith.constant 0 : i32
    return %arg0, %c0_i32, %arg1 : i32, i32, i32
  }
}

</mosaic_0001>

<llo_original>
// kernel: tpu_custom_call.1
$region0: #{tpu_custom_call.1}
  #allocation0 [shape = 'u32[]', space=smem, size = 0x4, offset = 0x4, fixed_abs, tag = 'smem constant byte address 0x4 - core index']
  #allocation1 [shape = 'u32[144,128]{1,0:T(1,128)}', space=vmem, size = 0x12000, scoped, tag = 'internal scratch']
  %s0 = inlined_call_operand.vmem [shape: f32[2,4,16], index: 0, kind: input, shape index: {}]
  %s1 = inlined_call_operand.hbm [shape: f32[2,4,16], index: 1, kind: input, shape index: {}]
  %s2 = inlined_call_operand.vmem [shape: f32[8,12], index: 2, kind: input, shape index: {}]
  %s3 = inlined_call_operand.vmem [shape: f32[8,1], index: 3, kind: input, shape index: {}]
  %s4 = inlined_call_operand.hbm [shape: f32[2,8,16], index: 4, kind: output, shape index: {}]
  %s5 = sld [smem:[#allocation0]]
  $region53: #{tpu_custom_call.1} parent=0
    _
  %s7 = ssub.s32 1, %s5
  %s8 = scalar_select 0, %s7, %s5
  $region1: #{tpu_custom_call.1} parent=0
    #allocation2 [shape = 'u8[4096]{0}', space=vmem, size = 0x1000, scoped, tag = 'input window, operand 1']
    #allocation3 [shape = 's32[2]{0}', space=sflag, size = 0x8, scoped, tag = 'scoped memory for tpu_custom_call.1']
    #allocation4 [shape = 's32[2]{0}', space=sflag, size = 0x8, scoped, tag = 'scoped memory for tpu_custom_call.1']
    #allocation5 [shape = 'u8[8192]{0}', space=vmem, size = 0x2000, scoped, tag = 'output window, operand 0']
    %9 = vsyncpa [#allocation3], 0
    %s10 = scalar_lea.sflag [#allocation3], 1
    %11 = vsyncpa %s10, 0
    %12 = vsyncpa [#allocation4], 0
    %s13 = scalar_lea.sflag [#allocation4], 1
    %14 = vsyncpa %s13, 0
    loop: start=0, step=1, limit=4
    $region2: #{tpu_custom_call.1} parent=1 // loop_pre_header
      _
    $region3: #{tpu_custom_call.1} parent=1 // loop_header
      %s16 = sphi 0, %s20
      %p17 = scmp.ge.s32.totalorder %s16, 4
      %s23 = sphi 0, %s35
      %s24 = sphi 0, %s31
      %s25 = sphi 0, %s23
      %s26 = sphi 0, %s24
      %s27 = sphi 0, %s25
      %s28 = sphi 0, %s26
      %s46 = sphi 0, %s48
      %s49 = sphi 0, %s46
      %s50 = sphi 0, %s49
      %s66 = sphi 0, %s50
      %s74 = sphi 0, %s76
      %s77 = sphi 0, %s74
      %s78 = sphi 0, %s77
      %s94 = sphi 0, %s78
      %s98 = sphi 0, %s98
      %s100 = sphi 0, %s98
      %s101 = sphi 0, %s100
      %s115 = sphi 0, %s101
      %s119 = sphi 0, %s119
      %s121 = sphi 0, %s119
      %s122 = sphi 0, %s121
      %s136 = sphi 0, %s122
      %s144 = sphi 0, %s146
      %s147 = sphi 0, %s144
      %s148 = sphi 0, %s147
      %s164 = sphi 0, %s148
    $region4: #{tpu_custom_call.1} parent=1 // loop_header_branch
      %19 = sbr.rel (%p17) target = $region8
    $region5: #{tpu_custom_call.1} parent=1 // loop_body
      %s21 = ssub.s32 %s16, 1
      %s22 = ssub.s32 %s16, 2
      %s29 = sadd.s32 1, %s24
      %p30 = scmp.ge.s32.totalorder %s29, 1
      %s31 = scalar_select %p30, 0, %s29
      %s32 = sadd.s32 1, %s23
      %s33 = scalar_select %p30, %s32, %s23
      %p34 = scmp.ge.s32.totalorder %s33, 2
      %s35 = scalar_select %p34, 0, %s33
      %s36 = ssub.s32 %s24, 1
      %p37 = scmp.gt.s32.totalorder %s36, 0
      %s38 = scalar_select %p37, %s36, 0
      %s39 = ssub.s32 %s31, 1
      %p40 = scmp.gt.s32.totalorder %s39, 0
      %s41 = scalar_select %p40, %s39, 0
      %s42 = ssub.s32 %s23, %s35
      %s43 = ssub.s32 %s38, %s41
      %s44 = sor.u32 %s42, %s43
      %p45 = scmp.eq.s32.totalorder %s44, 0
      %s47 = sadd.s32 %s46, 1
      %s48 = scalar_select %p45, %s46, %s47
      %p51 = pneg %p45
      %p52 = scmp.eq.s32.totalorder %s16, 1
      %p53 = por %p51, %p52
      %p54 = scmp.ne.s32.totalorder %s46, %s49
      %p55 = scmp.eq.s32.totalorder %s16, 0
      %p56 = por %p54, %p55
      %p57 = scmp.ne.s32.totalorder %s46, %s49
      %p58 = scmp.eq.s32.totalorder %s21, 1
      %p59 = por %p57, %p58
      %p60 = scmp.ne.s32.totalorder %s49, %s50
      %p61 = scmp.eq.s32.totalorder %s21, 0
      %p62 = por %p60, %p61
      %p63 = scmp.ne.s32.totalorder %s49, %s50
      %p64 = scmp.eq.s32.totalorder %s22, 1
      %p65 = por %p63, %p64
      %p67 = scmp.ne.s32.totalorder %s50, %s66
      %p68 = scmp.eq.s32.totalorder %s22, 0
      %p69 = por %p67, %p68
      %s70 = ssub.s32 %s23, %s35
      %s71 = ssub.s32 %s24, %s31
      %s72 = sor.u32 %s70, %s71
      %p73 = scmp.eq.s32.totalorder %s72, 0
      %s75 = sadd.s32 %s74, 1
      %s76 = scalar_select %p73, %s74, %s75
      %p79 = pneg %p73
      %p80 = scmp.eq.s32.totalorder %s16, 1
      %p81 = por %p79, %p80
      %p82 = scmp.ne.s32.totalorder %s74, %s77
      %p83 = scmp.eq.s32.totalorder %s16, 0
      %p84 = por %p82, %p83
      %p85 = scmp.ne.s32.totalorder %s74, %s77
      %p86 = scmp.eq.s32.totalorder %s21, 1
      %p87 = por %p85, %p86
      %p88 = scmp.ne.s32.totalorder %s77, %s78
      %p89 = scmp.eq.s32.totalorder %s21, 0
      %p90 = por %p88, %p89
      %p91 = scmp.ne.s32.totalorder %s77, %s78
      %p92 = scmp.eq.s32.totalorder %s22, 1
      %p93 = por %p91, %p92
      %p95 = scmp.ne.s32.totalorder %s78, %s94
      %p96 = scmp.eq.s32.totalorder %s22, 0
      %p97 = por %p95, %p96
      %s99 = sadd.s32 %s98, 1
      %p102 = scmp.eq.s32.totalorder %s16, 1
      %p103 = scmp.ne.s32.totalorder %s98, %s100
      %p104 = scmp.eq.s32.totalorder %s16, 0
      %p105 = por %p103, %p104
      %p106 = scmp.ne.s32.totalorder %s98, %s100
      %p107 = scmp.eq.s32.totalorder %s21, 1
      %p108 = por %p106, %p107
      %p109 = scmp.ne.s32.totalorder %s100, %s101
      %p110 = scmp.eq.s32.totalorder %s21, 0
      %p111 = por %p109, %p110
      %p112 = scmp.ne.s32.totalorder %s100, %s101
      %p113 = scmp.eq.s32.totalorder %s22, 1
      %p114 = por %p112, %p113
      %p116 = scmp.ne.s32.totalorder %s101, %s115
      %p117 = scmp.eq.s32.totalorder %s22, 0
      %p118 = por %p116, %p117
      %s120 = sadd.s32 %s119, 1
      %p123 = scmp.eq.s32.totalorder %s16, 1
      %p124 = scmp.ne.s32.totalorder %s119, %s121
      %p125 = scmp.eq.s32.totalorder %s16, 0
      %p126 = por %p124, %p125
      %p127 = scmp.ne.s32.totalorder %s119, %s121
      %p128 = scmp.eq.s32.totalorder %s21, 1
      %p129 = por %p127, %p128
      %p130 = scmp.ne.s32.totalorder %s121, %s122
      %p131 = scmp.eq.s32.totalorder %s21, 0
      %p132 = por %p130, %p131
      %p133 = scmp.ne.s32.totalorder %s121, %s122
      %p134 = scmp.eq.s32.totalorder %s22, 1
      %p135 = por %p133, %p134
      %p137 = scmp.ne.s32.totalorder %s122, %s136
      %p138 = scmp.eq.s32.totalorder %s22, 0
      %p139 = por %p137, %p138
      %s140 = ssub.s32 %s23, %s35
      %s141 = ssub.s32 %s24, %s31
      %s142 = sor.u32 %s140, %s141
      %p143 = scmp.eq.s32.totalorder %s142, 0
      %s145 = sadd.s32 %s144, 1
      %s146 = scalar_select %p143, %s144, %s145
      %p149 = pneg %p143
      %p150 = scmp.eq.s32.totalorder %s16, 1
      %p151 = por %p149, %p150
      %p152 = scmp.ne.s32.totalorder %s144, %s147
      %p153 = scmp.eq.s32.totalorder %s16, 0
      %p154 = por %p152, %p153
      %p155 = scmp.ne.s32.totalorder %s144, %s147
      %p156 = scmp.eq.s32.totalorder %s21, 1
      %p157 = por %p155, %p156
      %p158 = scmp.ne.s32.totalorder %s147, %s148
      %p159 = scmp.eq.s32.totalorder %s21, 0
      %p160 = por %p158, %p159
      %p161 = scmp.ne.s32.totalorder %s147, %s148
      %p162 = scmp.eq.s32.totalorder %s22, 1
      %p163 = por %p161, %p162
      %p165 = scmp.ne.s32.totalorder %s148, %s164
      %p166 = scmp.eq.s32.totalorder %s22, 0
      %p167 = por %p165, %p166
      %p168 = scmp.le.s32.totalorder 1, %s16
      %p169 = scmp.lt.s32.totalorder %s16, 3
      %p170 = pnand %p168, %p169
      %p171 = pneg %p170
      // Predicated region
      $region9: #{tpu_custom_call.1} parent=5 // pred_check
        _
      $region10: #{tpu_custom_call.1} parent=5 // pred_check_branch
        %173 = sbr.rel (%p170) target = $region12
      $region11: #{tpu_custom_call.1} parent=5 // pred_region
        %s174 = ssub.s32 %s16, 1
        // Predicated region
        $region13: #{tpu_custom_call.1} parent=11 // pred_check
          %p175 = pneg %p111
        $region14: #{tpu_custom_call.1} parent=11 // pred_check_branch
          %177 = sbr.rel (%p175) target = $region16
        $region15: #{tpu_custom_call.1} parent=11 // pred_region
          _
        $region16: #{tpu_custom_call.1} parent=11 // pred_fallthru
          _
        // Predicated region
        $region17: #{tpu_custom_call.1} parent=11 // pred_check
          %p178 = pneg %p132
        $region18: #{tpu_custom_call.1} parent=11 // pred_check_branch
          %180 = sbr.rel (%p178) target = $region20
        $region19: #{tpu_custom_call.1} parent=11 // pred_region
          _
        $region20: #{tpu_custom_call.1} parent=11 // pred_fallthru
          _
      $region12: #{tpu_custom_call.1} parent=5 // pred_fallthru
        _
      %p181 = scmp.lt.s32.totalorder %s16, 2
      // Predicated region
      $region21: #{tpu_custom_call.1} parent=5 // pred_check
        %p182 = pneg %p181
      $region22: #{tpu_custom_call.1} parent=5 // pred_check_branch
        %184 = sbr.rel (%p182) target = $region24
      $region23: #{tpu_custom_call.1} parent=5 // pred_region
        // Predicated region
        $region25: #{tpu_custom_call.1} parent=23 // pred_check
          %p185 = pneg %p56
        $region26: #{tpu_custom_call.1} parent=23 // pred_check_branch
          %187 = sbr.rel (%p185) target = $region28
        $region27: #{tpu_custom_call.1} parent=23 // pred_region
          %s188 = ssub.s32 %s24, 1
          %p189 = scmp.gt.s32.totalorder %s188, 0
          %s190 = scalar_select %p189, %s188, 0
          %p191 = scmp.lt.s32.totalorder %s23, 1
          %s192 = scalar_select %p191, %s23, 1
          %p193 = scmp.lt.s32.totalorder %s190, 0
          %s194 = scalar_select %p193, %s190, 0
          %s195 = sadd.s32 %s194, %s192
          %s196 = smul.addr %s195, 4
          %s197 = scalar_lea.vmem %s0, %s196
          %s198 = ssub.s32 %s24, 1
          %p199 = scmp.gt.s32.totalorder %s198, 0
          %s200 = scalar_select %p199, %s198, 0
        $region28: #{tpu_custom_call.1} parent=23 // pred_fallthru
          _
        // Predicated region
        $region29: #{tpu_custom_call.1} parent=23 // pred_check
          %p201 = pneg %p84
        $region30: #{tpu_custom_call.1} parent=23 // pred_check_branch
          %203 = sbr.rel (%p201) target = $region32
        $region31: #{tpu_custom_call.1} parent=23 // pred_region
          %s204 = sand.u32 %s74, 1
          %s205 = scalar_lea.sflag [#allocation3], %s204
          %s206 = sand.u32 %s74, 1
          %s207 = smul.addr %s206, 4
          %s208 = scalar_lea.vmem [#allocation2], %s207
          %s210 = ssub.s32 64, 64
          %211 = vsyncadd %s205, %s210
          %s212 = sadd.s32 %s24, %s23
          %s213 = smul.addr %s212, 64
          %s214 = scalar_lea.hbm %s1, %s213
          %s216 = sshll.u32 %s208, 4
          %s217 = int_to_ptr.vmem [resolvable:$true] %s216
          %219 = dma.hbm_to_vmem [thread:$0]  %s214, 64, %s217, %s205
        $region32: #{tpu_custom_call.1} parent=23 // pred_fallthru
          _
      $region24: #{tpu_custom_call.1} parent=5 // pred_fallthru
        _
      %p220 = scmp.le.s32.totalorder 1, %s16
      %p221 = scmp.lt.s32.totalorder %s16, 3
      %p222 = pnand %p220, %p221
      %p223 = pneg %p222
      // Predicated region
      $region33: #{tpu_custom_call.1} parent=5 // pred_check
        _
      $region34: #{tpu_custom_call.1} parent=5 // pred_check_branch
        %225 = sbr.rel (%p222) target = $region36
      $region35: #{tpu_custom_call.1} parent=5 // pred_region
        %s226 = ssub.s32 %s16, 1
        %s227 = sand.u32 %s77, 1
        %s228 = scalar_lea.sflag [#allocation3], %s227
        %s229 = sand.u32 %s77, 1
        %s230 = smul.addr %s229, 4
        %s231 = scalar_lea.vmem [#allocation2], %s230
        // Predicated region
        $region37: #{tpu_custom_call.1} parent=35 // pred_check
          %p232 = pneg %p90
        $region38: #{tpu_custom_call.1} parent=35 // pred_check_branch
          %234 = sbr.rel (%p232) target = $region40
        $region39: #{tpu_custom_call.1} parent=35 // pred_region
          %235 = dma.done %s228, 64
        $region40: #{tpu_custom_call.1} parent=35 // pred_fallthru
          _
        %s236 = ssub.s32 %s26, 1
        %p237 = scmp.gt.s32.totalorder %s236, 0
        %s238 = scalar_select %p237, %s236, 0
        %p239 = scmp.lt.s32.totalorder %s25, 1
        %s240 = scalar_select %p239, %s25, 1
        %p241 = scmp.lt.s32.totalorder %s238, 0
        %s242 = scalar_select %p241, %s238, 0
        %s243 = sadd.s32 %s242, %s240
        %s244 = smul.addr %s243, 4
        %s245 = scalar_lea.vmem %s0, %s244
        %p246 = pneg %p62
        %p247 = pneg %p59
        %s248 = sand.u32 %s77, 1
        %s249 = scalar_lea.sflag [#allocation3], %s248
        %s250 = sand.u32 %s77, 1
        %s251 = smul.addr %s250, 4
        %s252 = scalar_lea.vmem [#allocation2], %s251
        %p253 = pneg %p90
        %p254 = pneg %p87
        %p255 = pneg %p111
        %p256 = pneg %p108
        %p257 = pneg %p132
        %p258 = pneg %p129
        %p259 = pneg %p160
        %p260 = pneg %p157
        %s261 = sand.u32 %s147, 1
        %s262 = scalar_lea.sflag [#allocation4], %s261
        %s263 = sand.u32 %s147, 1
        %s264 = smul.addr %s263, 8
        %s265 = scalar_lea.vmem [#allocation5], %s264
        %s266 = ssub.s32 %s26, 1
        %p267 = scmp.gt.s32.totalorder %s266, 0
        %s268 = scalar_select %p267, %s266, 0
        %p269 = scmp.lt.s32.totalorder %s25, 1
        %s270 = scalar_select %p269, %s25, 1
        %p271 = scmp.lt.s32.totalorder %s268, 0
        %s272 = scalar_select %p271, %s268, 0
        %s273 = sadd.s32 %s272, %s270
        %s274 = smul.addr %s273, 4
        %s275 = scalar_lea.vmem %s0, %s274
        %s276 = ssub.s32 %s26, 1
        %p277 = scmp.gt.s32.totalorder %s276, 0
        %s278 = scalar_select %p277, %s276, 0
        %v279 = vld [vmem:[%s231] sm:$0xf]
        %v280 = vld [vmem:[%s275] sm:$0xf]
        %p281 = scmp.gt.s32.totalorder %s26, 0
        %s282 = scalar_select %p281, 1, 0
        %v283 = vstv %s282
        %vm284 = vcmp.eq.s32.totalorder %v283, 1
        %v285 = vsel %vm284, %v280, 0.0
        %287 = vrot.lane.b32.xlu0 %v279, 16
        %v288 = vpop.permute.xlu0 %287
        %vm290 = vcmask 130048
        %v291 = vsel %vm290, %v285, %v288
        %v293 = vrot.slane %v291, 4
        %294 = vrot.lane.b32.xlu0 %v293, 126
        %v295 = vpop.permute.xlu0 %294
        %297 = vrot.lane.b32.xlu0 %v291, 124
        %v298 = vpop.permute.xlu0 %297
        %vm299 = vcmask 1043456
        %v300 = vsel %vm299, %v291, %v295
        %v301 = vld [vmem:[%s2] sm:$0xff]
        %v302 = vld [vmem:[%s3] sm:$0xff]
        %304 = vset.pattern.permute.xlu0 0
        %305 = vperm.xlu0 %304, %v302
        %v306 = vpop.permute.xlu0 %305
        %309 = vrot.lane.b32.xlu0 %v300, 116
        %v310 = vpop.permute.xlu0 %309
        %311 = vrot.lane.b32.xlu0 %v298, 116
        %v312 = vpop.permute.xlu0 %311
        %vm314 = vcmask 97280
        %v316 = vsel %vm314, %v301, 0
        %v318 = vsel %vm299, %v312, 0
        %320 = vmatprep.subr.mxu0 0.0
        %321 = vmatpush1.msra.mxu0 %v310
        %322 = vmatprep.subr.mxu0 0.0
        %323 = vmatpush1.msra.mxu0 %v318
        %324 = vmatprep.subr.mxu0 0.0
        %325 = vmatpush1.msra.mxu0 0.0
        %326 = vmatprep.subr.mxu0 0.0
        %327 = vmatpush1.msra.mxu0 0.0
        %328 = vmatprep.subr.mxu0 0.0
        %329 = vmatpush1.msra.mxu0 0.0
        %330 = vmatprep.subr.mxu0 0.0
        %331 = vmatpush1.msra.mxu0 0.0
        %332 = vmatprep.subr.mxu0 0.0
        %333 = vmatpush1.msra.mxu0 0.0
        %334 = vmatprep.subr.mxu0 0.0
        %335 = vmatpush1.msra.mxu0 0.0
        %336 = vmatprep.subr.mxu0 0.0
        %337 = vmatpush1.msra.mxu0 0.0
        %338 = vmatprep.subr.mxu0 0.0
        %339 = vmatpush1.msra.mxu0 0.0
        %340 = vmatprep.subr.mxu0 0.0
        %341 = vmatpush1.msra.mxu0 0.0
        %342 = vmatprep.subr.mxu0 0.0
        %343 = vmatpush1.msra.mxu0 0.0
        %344 = vmatprep.subr.mxu0 0.0
        %345 = vmatpush1.msra.mxu0 0.0
        %346 = vmatprep.subr.mxu0 0.0
        %347 = vmatpush1.msra.mxu0 0.0
        %348 = vmatprep.subr.mxu0 0.0
        %349 = vmatpush1.msra.mxu0 0.0
        %350 = vmatprep.subr.mxu0 0.0
        %351 = vmatpush1.msra.mxu0 0.0
        %352 = vmatprep.subr.mxu0 0.0
        %353 = vmatpush1.msra.mxu0 0.0
        %354 = vmatprep.subr.mxu0 0.0
        %355 = vmatpush1.msra.mxu0 0.0
        %356 = vmatprep.subr.mxu0 0.0
        %357 = vmatpush1.msra.mxu0 0.0
        %358 = vmatprep.subr.mxu0 0.0
        %359 = vmatpush1.msra.mxu0 0.0
        %360 = vmatprep.subr.mxu0 0.0
        %361 = vmatpush1.msra.mxu0 0.0
        %362 = vmatprep.subr.mxu0 0.0
        %363 = vmatpush1.msra.mxu0 0.0
        %364 = vmatprep.subr.mxu0 0.0
        %365 = vmatpush1.msra.mxu0 0.0
        %366 = vmatprep.subr.mxu0 0.0
        %367 = vmatpush1.msra.mxu0 0.0
        %368 = vmatprep.subr.mxu0 0.0
        %369 = vmatpush1.msra.mxu0 0.0
        %370 = vmatprep.subr.mxu0 0.0
        %371 = vmatpush1.msra.mxu0 0.0
        %372 = vmatprep.subr.mxu0 0.0
        %373 = vmatpush1.msra.mxu0 0.0
        %374 = vmatprep.subr.mxu0 0.0
        %375 = vmatpush1.msra.mxu0 0.0
        %376 = vmatprep.subr.mxu0 0.0
        %377 = vmatpush1.msra.mxu0 0.0
        %378 = vmatprep.subr.mxu0 0.0
        %379 = vmatpush1.msra.mxu0 0.0
        %380 = vmatprep.subr.mxu0 0.0
        %381 = vmatpush1.msra.mxu0 0.0
        %382 = vmatprep.subr.mxu0 0.0
        %383 = vmatpush1.msra.mxu0 0.0
        %384 = vmatprep.mubr.f32.mxu0 0.0
        %385 = vmatmul.mubr.f32.gmra.mrb[0].mxu0 %v316
        %v386 = vpop.f32.mrb[0].mxu0
        %v387 = vadd.f32 %v306, %v386
        %v388 = vpop.f32.mrb[0].mxu0
        %389 = vdwg.mxu0
        %v390 = vmax.f32 %v387, 0.0
        %391 = vst.msk [vmem:[%s265] sm:$0xff] %vm290, %v390
        %s392 = sand.u32 %s147, 1
        %s393 = scalar_lea.sflag [#allocation4], %s392
        %s394 = sand.u32 %s147, 1
        %s395 = smul.addr %s394, 8
        %s396 = scalar_lea.vmem [#allocation5], %s395
        // Predicated region
        $region41: #{tpu_custom_call.1} parent=35 // pred_check
          %p397 = pneg %p157
        $region42: #{tpu_custom_call.1} parent=35 // pred_check_branch
          %399 = sbr.rel (%p397) target = $region44
        $region43: #{tpu_custom_call.1} parent=35 // pred_region
          %s401 = ssub.s32 128, 128
          %402 = vsyncadd %s393, %s401
          %s403 = sadd.s32 %s26, %s25
          %s404 = smul.addr %s403, 128
          %s405 = scalar_lea.hbm %s4, %s404
          %s407 = sshll.u32 %s396, 4
          %s408 = int_to_ptr.vmem [resolvable:$true] %s407
          %410 = dma.vmem_to_hbm [thread:$0]  %s408, 128, %s405, %s393
        $region44: #{tpu_custom_call.1} parent=35 // pred_fallthru
          _
      $region36: #{tpu_custom_call.1} parent=5 // pred_fallthru
        _
      %p411 = scmp.le.s32.totalorder 2, %s16
      // Predicated region
      $region45: #{tpu_custom_call.1} parent=5 // pred_check
        %p412 = pneg %p411
      $region46: #{tpu_custom_call.1} parent=5 // pred_check_branch
        %414 = sbr.rel (%p412) target = $region48
      $region47: #{tpu_custom_call.1} parent=5 // pred_region
        %s415 = ssub.s32 %s16, 2
        // Predicated region
        $region49: #{tpu_custom_call.1} parent=47 // pred_check
          %p416 = pneg %p163
        $region50: #{tpu_custom_call.1} parent=47 // pred_check_branch
          %418 = sbr.rel (%p416) target = $region52
        $region51: #{tpu_custom_call.1} parent=47 // pred_region
          %s419 = sand.u32 %s148, 1
          %s420 = scalar_lea.sflag [#allocation4], %s419
          %s421 = sand.u32 %s148, 1
          %s422 = smul.addr %s421, 8
          %s423 = scalar_lea.vmem [#allocation5], %s422
          %424 = dma.done %s420, 128
        $region52: #{tpu_custom_call.1} parent=47 // pred_fallthru
          _
      $region48: #{tpu_custom_call.1} parent=5 // pred_fallthru
        _
    $region6: #{tpu_custom_call.1} parent=1 // loop_footer
      %s20 = sadd.s32 1, %s16
    $region7: #{tpu_custom_call.1} parent=1 // loop_footer_branch
      %15 = sbr.rel target = $region3
    $region8: #{tpu_custom_call.1} parent=1 // loop_exit
      _
    %425 = vsyncpa [#allocation3], 1
    %s426 = scalar_lea.sflag [#allocation3], 1
    %427 = vsyncpa %s426, 1
    %428 = vsyncpa [#allocation4], 1
    %s429 = scalar_lea.sflag [#allocation4], 1
    %430 = vsyncpa %s429, 1

</llo_original>
